<compile_context>
chip_gen: v7x
topology: tpu7x:2x2x1
jax: 0.10.0
libtpu: 0.0.40
codegen_flags: <defaults>
</compile_context>

<pallas_src>
import jax
import jax.numpy as jnp
from jax.experimental import pallas as pl
from jax.experimental.pallas import tpu as pltpu


def _round_up(x: int, m: int) -> int:
    return (x + m - 1) // m * m


def _debias_forward_kernel(u_ref, i_ref, e_ref, w_ref, b_ref, scores_ref, logp_ref):
    """One batch tile, batch-on-lanes layout.

    u_ref/i_ref: (2D, TB) bf16 fused [inv ; env] user/item embeddings (transposed).
    e_ref:       (D,  TB) bf16 environment embeddings (transposed).
    w_ref:       (E,  D)  f32  classifier weight (VMEM-resident across tiles).
    b_ref:       (E,  1)  f32  classifier bias   (VMEM-resident across tiles).
    scores_ref:  (2,  TB) f32  row 0 = invariant_score, row 1 = env_aware_score.
    logp_ref:    (E,  TB) f32  env classifier log-probs (transposed).
    """
    d = e_ref.shape[0]

    # Upcast once in VMEM; HBM traffic stays bf16 (the bottleneck).  f32 VPU math is
    # v5e-safe (no bf16 VALUs there); on v6e/v7x this is free slack in a mem-bound kernel.
    u = u_ref[...].astype(jnp.float32)             # (2D, TB)
    it = i_ref[...].astype(jnp.float32)            # (2D, TB)
    e = e_ref[...].astype(jnp.float32)             # (D,  TB)

    prod = u * it                                  # (2D, TB)
    inv_pref = prod[:d, :]                         # (D, TB)  sublane-aligned slice (D % 8 == 0)
    env_pref = prod[d:, :] * e                     # (D, TB)

    inv_score = jnp.sum(inv_pref, axis=0, keepdims=True)                 # (1, TB)
    env_score = inv_score + jnp.sum(env_pref, axis=0, keepdims=True)     # (1, TB)

    # Implicit-feedback scores: sigmoid (exp goes to the EUP slot, effectively free).
    inv_sig = 1.0 / (1.0 + jnp.exp(-inv_score))
    env_sig = 1.0 / (1.0 + jnp.exp(-env_score))
    scores_ref[...] = jnp.concatenate([inv_sig, env_sig], axis=0)        # (2, TB) lane-dense

    # Environment classifier: linear + numerically stable log_softmax over classes
    # (classes live on the sublane axis, so the reductions are cheap XLU work).
    logits = jnp.dot(w_ref[...], inv_pref,
                     preferred_element_type=jnp.float32) + b_ref[...]    # (E, TB)
    m = jnp.max(logits, axis=0, keepdims=True)
    z = logits - m
    lse = jnp.log(jnp.sum(jnp.exp(z), axis=0, keepdims=True))
    logp_ref[...] = z - lse                                              # (E, TB) lane-dense


def debias_implicit_forward(user_ids, item_ids, env_ids, params, *, tile_batch=2048):
    """InvPref-style implicit forward.

    Returns (invariant_score[B], env_aware_score[B], env_log_probs[B, E]).
    """
    u_tab = params["embed_user"]            # (user_num, 2D) bf16, [inv | env]
    i_tab = params["embed_item"]            # (item_num, 2D) bf16, [inv | env]
    e_tab = params["embed_env"]             # (env_num, D)   bf16
    w_cls = params["cls_w"]                 # (D, E) f32
    b_cls = params["cls_b"]                 # (E,)   f32

    two_d = u_tab.shape[1]
    d = two_d // 2
    e_num = w_cls.shape[1]
    B = user_ids.shape[0]

    # Batch tile on the LANE axis: multiple of 128 and as large as feasible (per-step
    # pipeline overhead ~0.35us dominates small tiles), but keep >=2 grid steps when the
    # batch allows so v7x's two TensorCores both get work.  At D=32 even TB=8192 is only
    # a few MiB of double-buffered bf16 input stream — comfortably inside every
    # generation's scoped VMEM (re-derive / set vmem_limit_bytes if factor_num grows).
    tb = min(_round_up(tile_batch, 128), _round_up(max(B, 1), 128))
    half = (_round_up(B, 128) // 2) // 128 * 128
    if half >= 128:
        tb = min(tb, half)
    b_pad = _round_up(B, tb)
    pad = b_pad - B
    if pad:
        user_ids = jnp.pad(user_ids, (0, pad))
        item_ids = jnp.pad(item_ids, (0, pad))
        env_ids = jnp.pad(env_ids, (0, pad))

    # --- glue: embedding-table gathers (data-dependent row lookups), then flip to
    # batch-on-lanes so every kernel stream is lane-dense.  XLA fuses the transpose
    # into the gather's output write (layout plumbing, not extra compute).
    u_t = jnp.take(u_tab, user_ids, axis=0).T     # (2D, B_pad) bf16
    i_t = jnp.take(i_tab, item_ids, axis=0).T     # (2D, B_pad) bf16
    e_t = jnp.take(e_tab, env_ids, axis=0).T      # (D,  B_pad) bf16

    w_t = w_cls.T.astype(jnp.float32)                      # (E, D) resident
    b_col = b_cls.reshape(e_num, 1).astype(jnp.float32)    # (E, 1) resident

    itemsize_in = jnp.dtype(u_t.dtype).itemsize
    bytes_accessed = (b_pad * (2 * two_d + d) * itemsize_in      # streamed inputs
                      + w_t.size * 4 + b_col.size * 4            # resident weights
                      + b_pad * (2 + e_num) * 4)                 # outputs
    cost = pl.CostEstimate(
        flops=b_pad * (3 * two_d + 2 * d * e_num + 6 * e_num),
        transcendentals=b_pad * (e_num + 2),
        bytes_accessed=bytes_accessed,
    )

    grid = (b_pad // tb,)
    scores, logp_t = pl.pallas_call(
        _debias_forward_kernel,
        out_shape=(
            jax.ShapeDtypeStruct((2, b_pad), jnp.float32),
            jax.ShapeDtypeStruct((e_num, b_pad), jnp.float32),
        ),
        grid=grid,
        in_specs=[
            pl.BlockSpec((two_d, tb), lambda bi: (0, bi)),   # fused user emb (transposed)
            pl.BlockSpec((two_d, tb), lambda bi: (0, bi)),   # fused item emb (transposed)
            pl.BlockSpec((d, tb), lambda bi: (0, bi)),       # env emb        (transposed)
            pl.BlockSpec((e_num, d), lambda bi: (0, 0)),     # classifier W^T (resident)
            pl.BlockSpec((e_num, 1), lambda bi: (0, 0)),     # classifier b   (resident)
        ],
        out_specs=(
            pl.BlockSpec((2, tb), lambda bi: (0, bi)),       # scores,    lane-dense
            pl.BlockSpec((e_num, tb), lambda bi: (0, bi)),   # log-probs, lane-dense
        ),
        compiler_params=pltpu.CompilerParams(
            dimension_semantics=("parallel",),   # shard batch tiles across v7x's 2 TCs
        ),
        cost_estimate=cost,
    )(u_t, i_t, e_t, w_t, b_col)

    return scores[0, :B], scores[1, :B], logp_t[:, :B].T


def init_params(key, user_num, item_num, env_num, factor_num,
                embed_dtype=jnp.bfloat16):
    ks = jax.random.split(key, 7)
    scale = 0.1
    u_inv = scale * jax.random.normal(ks[0], (user_num, factor_num), jnp.float32)
    i_inv = scale * jax.random.normal(ks[1], (item_num, factor_num), jnp.float32)
    u_env = scale * jax.random.normal(ks[2], (user_num, factor_num), jnp.float32)
    i_env = scale * jax.random.normal(ks[3], (item_num, factor_num), jnp.float32)
    e_emb = scale * jax.random.normal(ks[4], (env_num, factor_num), jnp.float32)
    return {
        # Fused [inv | env] tables, stored in bf16 (halves gather + kernel HBM bytes).
        "embed_user": jnp.concatenate([u_inv, u_env], axis=-1).astype(embed_dtype),
        "embed_item": jnp.concatenate([i_inv, i_env], axis=-1).astype(embed_dtype),
        "embed_env": e_emb.astype(embed_dtype),
        "cls_w": scale * jax.random.normal(ks[5], (factor_num, env_num), jnp.float32),
        "cls_b": 0.01 * jax.random.normal(ks[6], (env_num,), jnp.float32),
    }


def _reference_forward(user_ids, item_ids, env_ids, params):
    d = params["embed_env"].shape[1]
    u = params["embed_user"][user_ids].astype(jnp.float32)
    it = params["embed_item"][item_ids].astype(jnp.float32)
    e = params["embed_env"][env_ids].astype(jnp.float32)
    inv_pref = u[:, :d] * it[:, :d]
    env_pref = u[:, d:] * it[:, d:] * e
    inv_score = jnp.sum(inv_pref, axis=-1)
    env_score = inv_score + jnp.sum(env_pref, axis=-1)
    inv_out = 1.0 / (1.0 + jnp.exp(-inv_score))
    env_out = 1.0 / (1.0 + jnp.exp(-env_score))
    logits = jnp.dot(inv_pref, params["cls_w"],
                     preferred_element_type=jnp.float32,
                     precision=jax.lax.Precision.HIGHEST) + params["cls_b"]
    logp = jax.nn.log_softmax(logits, axis=-1)
    return inv_out, env_out, logp


if __name__ == "__main__":
    user_num, item_num, env_num, factor_num = 16, 24, 4, 32
    batch = 300  # not a multiple of 128 -> exercises padding + a multi-step grid (tb=128)

    key = jax.random.PRNGKey(0)
    kp, ku, ki, ke = jax.random.split(key, 4)
    params = init_params(kp, user_num, item_num, env_num, factor_num)

    user_ids = jax.random.randint(ku, (batch,), 0, user_num)
    item_ids = jax.random.randint(ki, (batch,), 0, item_num)
    env_ids = jax.random.randint(ke, (batch,), 0, env_num)

    inv_score, env_score, env_logp = debias_implicit_forward(
        user_ids, item_ids, env_ids, params)
    jax.block_until_ready((inv_score, env_score, env_logp))

    # sanity check against plain-JAX reference
    r_inv, r_env, r_logp = _reference_forward(user_ids, item_ids, env_ids, params)
    assert inv_score.shape == (batch,) and env_score.shape == (batch,)
    assert env_logp.shape == (batch, env_num)
    assert jnp.allclose(inv_score, r_inv, atol=1e-4)
    assert jnp.allclose(env_score, r_env, atol=1e-4)
    assert jnp.allclose(env_logp, r_logp, atol=1e-3)

    print("KERNEL_OK")
</pallas_src>

<mosaic_0001>
module attributes {stable_mosaic.version = 11 : i64} {
  func.func @_debias_forward_kernel(%arg0: i32, %arg1: memref<64x128xbf16, #tpu.memory_space<vmem>>, %arg2: memref<64x128xbf16, #tpu.memory_space<vmem>>, %arg3: memref<32x128xbf16, #tpu.memory_space<vmem>>, %arg4: memref<4x32xf32, #tpu.memory_space<vmem>>, %arg5: memref<4x1xf32, #tpu.memory_space<vmem>>, %arg6: memref<2x128xf32, #tpu.memory_space<vmem>>, %arg7: memref<4x128xf32, #tpu.memory_space<vmem>>) attributes {dimension_semantics = [#tpu.dimension_semantics<parallel>], iteration_bounds = array<i64: 3>, scalar_prefetch = 0 : i64, scratch_operands = 0 : i64, tpu.core_type = #tpu.core_type<tc>, window_params = [{transform_indices = @transform_0, window_bounds = array<i64: 64, 128>}, {transform_indices = @transform_1, window_bounds = array<i64: 64, 128>}, {transform_indices = @transform_2, window_bounds = array<i64: 32, 128>}, {pipeline_mode = #tpu.pipeline_mode<synchronous>, transform_indices = @transform_3, window_bounds = array<i64: 4, 32>}, {pipeline_mode = #tpu.pipeline_mode<synchronous>, transform_indices = @transform_4, window_bounds = array<i64: 4, 1>}, {transform_indices = @transform_5, window_bounds = array<i64: 2, 128>}, {transform_indices = @transform_6, window_bounds = array<i64: 4, 128>}]} {
    %c0 = arith.constant 0 : index
    %c0_0 = arith.constant 0 : index
    %0 = vector.load %arg1[%c0, %c0_0] : memref<64x128xbf16, #tpu.memory_space<vmem>>, vector<64x128xbf16>
    %1 = arith.extf %0 : vector<64x128xbf16> to vector<64x128xf32>
    %c0_1 = arith.constant 0 : index
    %c0_2 = arith.constant 0 : index
    %2 = vector.load %arg2[%c0_1, %c0_2] : memref<64x128xbf16, #tpu.memory_space<vmem>>, vector<64x128xbf16>
    %3 = arith.extf %2 : vector<64x128xbf16> to vector<64x128xf32>
    %c0_3 = arith.constant 0 : index
    %c0_4 = arith.constant 0 : index
    %4 = vector.load %arg3[%c0_3, %c0_4] : memref<32x128xbf16, #tpu.memory_space<vmem>>, vector<32x128xbf16>
    %5 = arith.extf %4 : vector<32x128xbf16> to vector<32x128xf32>
    %6 = arith.mulf %1, %3 : vector<64x128xf32>
    %7 = vector.extract_strided_slice %6 {offsets = [0, 0], sizes = [32, 128], strides = [1, 1]} : vector<64x128xf32> to vector<32x128xf32>
    %8 = vector.extract_strided_slice %6 {offsets = [32, 0], sizes = [32, 128], strides = [1, 1]} : vector<64x128xf32> to vector<32x128xf32>
    %9 = arith.mulf %8, %5 : vector<32x128xf32>
    %cst = arith.constant dense<0.000000e+00> : vector<128xf32>
    %10 = vector.multi_reduction <add>, %7, %cst [0] : vector<32x128xf32> to vector<128xf32>
    %11 = vector.shape_cast %10 : vector<128xf32> to vector<1x128xf32>
    %cst_5 = arith.constant dense<0.000000e+00> : vector<128xf32>
    %12 = vector.multi_reduction <add>, %9, %cst_5 [0] : vector<32x128xf32> to vector<128xf32>
    %13 = vector.shape_cast %12 : vector<128xf32> to vector<1x128xf32>
    %14 = arith.addf %11, %13 : vector<1x128xf32>
    %cst_6 = arith.constant 0.000000e+00 : f32
    %15 = vector.broadcast %cst_6 : f32 to vector<1x128xf32>
    %16 = arith.subf %15, %11 : vector<1x128xf32>
    %17 = math.exp %16 : vector<1x128xf32>
    %cst_7 = arith.constant 1.000000e+00 : f32
    %18 = vector.broadcast %cst_7 : f32 to vector<1x128xf32>
    %19 = arith.addf %18, %17 : vector<1x128xf32>
    %cst_8 = arith.constant 1.000000e+00 : f32
    %20 = vector.broadcast %cst_8 : f32 to vector<1x128xf32>
    %21 = arith.divf %20, %19 : vector<1x128xf32>
    %cst_9 = arith.constant 0.000000e+00 : f32
    %22 = vector.broadcast %cst_9 : f32 to vector<1x128xf32>
    %23 = arith.subf %22, %14 : vector<1x128xf32>
    %24 = math.exp %23 : vector<1x128xf32>
    %cst_10 = arith.constant 1.000000e+00 : f32
    %25 = vector.broadcast %cst_10 : f32 to vector<1x128xf32>
    %26 = arith.addf %25, %24 : vector<1x128xf32>
    %cst_11 = arith.constant 1.000000e+00 : f32
    %27 = vector.broadcast %cst_11 : f32 to vector<1x128xf32>
    %28 = arith.divf %27, %26 : vector<1x128xf32>
    %29 = tpu.concatenate %21, %28 in 0 : vector<1x128xf32>, vector<1x128xf32> -> vector<2x128xf32>
    %c0_12 = arith.constant 0 : index
    %c0_13 = arith.constant 0 : index
    %30 = vector.load %arg6[%c0_12, %c0_13] : memref<2x128xf32, #tpu.memory_space<vmem>>, vector<2x128xf32>
    tpu.vector_store %arg6[%c0_12, %c0_13], %29 {strides = array<i32>} : memref<2x128xf32, #tpu.memory_space<vmem>>, vector<2x128xf32>,
    %c0_14 = arith.constant 0 : index
    %c0_15 = arith.constant 0 : index
    %31 = vector.load %arg4[%c0_14, %c0_15] : memref<4x32xf32, #tpu.memory_space<vmem>>, vector<4x32xf32>
    %cst_16 = arith.constant dense<0.000000e+00> : vector<4x128xf32>
    %32 = tpu.matmul %31, %7, %cst_16 {dimension_numbers = #tpu.dot_dimension_numbers<[1], [0], [0], [1], [0, 0, 1, 1], [], []>} : vector<4x32xf32>, vector<32x128xf32>, vector<4x128xf32> -> vector<4x128xf32>
    %c0_17 = arith.constant 0 : index
    %c0_18 = arith.constant 0 : index
    %33 = vector.load %arg5[%c0_17, %c0_18] : memref<4x1xf32, #tpu.memory_space<vmem>>, vector<4x1xf32>
    %34 = vector.broadcast %33 : vector<4x1xf32> to vector<4x128xf32>
    %35 = arith.addf %32, %34 : vector<4x128xf32>
    %cst_19 = arith.constant dense<0xFF800000> : vector<128xf32>
    %36 = vector.multi_reduction <maximumf>, %35, %cst_19 [0] : vector<4x128xf32> to vector<128xf32>
    %37 = vector.shape_cast %36 : vector<128xf32> to vector<1x128xf32>
    %38 = vector.broadcast %37 : vector<1x128xf32> to vector<4x128xf32>
    %39 = arith.subf %35, %38 : vector<4x128xf32>
    %40 = math.exp %39 : vector<4x128xf32>
    %cst_20 = arith.constant dense<0.000000e+00> : vector<128xf32>
    %41 = vector.multi_reduction <add>, %40, %cst_20 [0] : vector<4x128xf32> to vector<128xf32>
    %42 = vector.shape_cast %41 : vector<128xf32> to vector<1x128xf32>
    %43 = math.log %42 : vector<1x128xf32>
    %44 = vector.broadcast %43 : vector<1x128xf32> to vector<4x128xf32>
    %45 = arith.subf %39, %44 : vector<4x128xf32>
    %c0_21 = arith.constant 0 : index
    %c0_22 = arith.constant 0 : index
    %46 = vector.load %arg7[%c0_21, %c0_22] : memref<4x128xf32, #tpu.memory_space<vmem>>, vector<4x128xf32>
    tpu.vector_store %arg7[%c0_21, %c0_22], %45 {strides = array<i32>} : memref<4x128xf32, #tpu.memory_space<vmem>>, vector<4x128xf32>,
    return
  }
  func.func @transform_0(%arg0: i32) -> (i32, i32) {
    %c0_i32 = arith.constant 0 : i32
    %c0_i32_0 = arith.constant 0 : i32
    return %c0_i32, %arg0 : i32, i32
  }
  func.func @transform_1(%arg0: i32) -> (i32, i32) {
    %c0_i32 = arith.constant 0 : i32
    %c0_i32_0 = arith.constant 0 : i32
    return %c0_i32, %arg0 : i32, i32
  }
  func.func @transform_2(%arg0: i32) -> (i32, i32) {
    %c0_i32 = arith.constant 0 : i32
    %c0_i32_0 = arith.constant 0 : i32
    return %c0_i32, %arg0 : i32, i32
  }
  func.func @transform_3(%arg0: i32) -> (i32, i32) {
    %c0_i32 = arith.constant 0 : i32
    %c0_i32_0 = arith.constant 0 : i32
    %c0_i32_1 = arith.constant 0 : i32
    return %c0_i32, %c0_i32_0 : i32, i32
  }
  func.func @transform_4(%arg0: i32) -> (i32, i32) {
    %c0_i32 = arith.constant 0 : i32
    %c0_i32_0 = arith.constant 0 : i32
    %c0_i32_1 = arith.constant 0 : i32
    return %c0_i32, %c0_i32_0 : i32, i32
  }
  func.func @transform_5(%arg0: i32) -> (i32, i32) {
    %c0_i32 = arith.constant 0 : i32
    %c0_i32_0 = arith.constant 0 : i32
    return %c0_i32, %arg0 : i32, i32
  }
  func.func @transform_6(%arg0: i32) -> (i32, i32) {
    %c0_i32 = arith.constant 0 : i32
    %c0_i32_0 = arith.constant 0 : i32
    return %c0_i32, %arg0 : i32, i32
  }
}

</mosaic_0001>

<llo_original>
// kernel: tpu_custom_call.1
$region0: #{tpu_custom_call.1}
  #allocation0 [shape = 'u32[]', space=smem, size = 0x4, offset = 0x4, fixed_abs, tag = 'smem constant byte address 0x4 - core index']
  #allocation1 [shape = 'u32[144,128]{1,0:T(1,128)}', space=vmem, size = 0x12000, scoped, tag = 'internal scratch']
  %s0 = inlined_call_operand.hbm [shape: bf16[64,384], index: 0, kind: input, shape index: {}]
  %s1 = inlined_call_operand.hbm [shape: bf16[64,384], index: 1, kind: input, shape index: {}]
  %s2 = inlined_call_operand.hbm [shape: bf16[32,384], index: 2, kind: input, shape index: {}]
  %s3 = inlined_call_operand.vmem [shape: f32[4,32], index: 3, kind: input, shape index: {}]
  %s4 = inlined_call_operand.vmem [shape: f32[4,1], index: 4, kind: input, shape index: {}]
  %s5 = inlined_call_operand.hbm [shape: f32[2,384], index: 5, kind: output, shape index: {0}]
  %s6 = inlined_call_operand.hbm [shape: f32[4,384], index: 6, kind: output, shape index: {1}]
  %7 = xla_tuple %s5, %s6
  %s8 = sld [smem:[#allocation0]]
  $region73: #{tpu_custom_call.1} parent=0
    _
  %s10 = ssub.s32 1, %s8
  %s11 = scalar_select 0, %s10, %s8
  $region1: #{tpu_custom_call.1} parent=0
    #allocation2 [shape = 'u8[32768]{0}', space=vmem, size = 0x8000, scoped, tag = 'input window, operand 0']
    #allocation3 [shape = 's32[2]{0}', space=sflag, size = 0x8, scoped, tag = 'scoped memory for tpu_custom_call.1']
    #allocation4 [shape = 's32[2]{0}', space=sflag, size = 0x8, scoped, tag = 'scoped memory for tpu_custom_call.1']
    #allocation5 [shape = 'u8[32768]{0}', space=vmem, size = 0x8000, scoped, tag = 'input window, operand 1']
    #allocation6 [shape = 's32[2]{0}', space=sflag, size = 0x8, scoped, tag = 'scoped memory for tpu_custom_call.1']
    #allocation7 [shape = 'u8[16384]{0}', space=vmem, size = 0x4000, scoped, tag = 'input window, operand 2']
    #allocation8 [shape = 'u8[2048]{0}', space=vmem, size = 0x800, scoped, tag = 'output window, operand 0']
    #allocation9 [shape = 'u8[4096]{0}', space=vmem, size = 0x1000, scoped, tag = 'output window, operand 1']
    #allocation10 [shape = 's32[2]{0}', space=sflag, size = 0x8, scoped, tag = 'scoped memory for tpu_custom_call.1']
    %12 = vsyncpa [#allocation3], 0
    %s13 = scalar_lea.sflag [#allocation3], 1
    %14 = vsyncpa %s13, 0
    %15 = vsyncpa [#allocation6], 0
    %s16 = scalar_lea.sflag [#allocation6], 1
    %17 = vsyncpa %s16, 0
    %18 = vsyncpa [#allocation4], 0
    %s19 = scalar_lea.sflag [#allocation4], 1
    %20 = vsyncpa %s19, 0
    %21 = vsyncpa [#allocation10], 0
    %s22 = scalar_lea.sflag [#allocation10], 1
    %23 = vsyncpa %s22, 0
    loop: start=0, step=1, limit=5
    $region2: #{tpu_custom_call.1} parent=1 // loop_pre_header
      _
    $region3: #{tpu_custom_call.1} parent=1 // loop_header
      %s25 = sphi 0, %s29
      %p26 = scmp.ge.s32.totalorder %s25, 5
      %s35 = sphi 0, %s37
      %s38 = sphi 0, %s35
      %s39 = sphi 0, %s38
      %s55 = sphi 0, %s39
      %s61 = sphi 0, %s63
      %s64 = sphi 0, %s61
      %s65 = sphi 0, %s64
      %s81 = sphi 0, %s65
      %s87 = sphi 0, %s89
      %s90 = sphi 0, %s87
      %s91 = sphi 0, %s90
      %s107 = sphi 0, %s91
      %s111 = sphi 0, %s111
      %s113 = sphi 0, %s111
      %s114 = sphi 0, %s113
      %s128 = sphi 0, %s114
      %s132 = sphi 0, %s132
      %s134 = sphi 0, %s132
      %s135 = sphi 0, %s134
      %s149 = sphi 0, %s135
      %s155 = sphi 0, %s157
      %s158 = sphi 0, %s155
      %s159 = sphi 0, %s158
      %s175 = sphi 0, %s159
      %s181 = sphi 0, %s183
      %s184 = sphi 0, %s181
      %s185 = sphi 0, %s184
      %s201 = sphi 0, %s185
    $region4: #{tpu_custom_call.1} parent=1 // loop_header_branch
      %28 = sbr.rel (%p26) target = $region8
    $region5: #{tpu_custom_call.1} parent=1 // loop_body
      %s30 = ssub.s32 %s25, 1
      %s31 = ssub.s32 %s25, 2
      %s32 = sadd.s32 %s25, 1
      %s33 = ssub.s32 %s25, %s32
      %p34 = scmp.eq.s32.totalorder %s33, 0
      %s36 = sadd.s32 %s35, 1
      %s37 = scalar_select %p34, %s35, %s36
      %p40 = pneg %p34
      %p41 = scmp.eq.s32.totalorder %s25, 2
      %p42 = por %p40, %p41
      %p43 = scmp.ne.s32.totalorder %s35, %s38
      %p44 = scmp.eq.s32.totalorder %s25, 0
      %p45 = por %p43, %p44
      %p46 = scmp.ne.s32.totalorder %s35, %s38
      %p47 = scmp.eq.s32.totalorder %s30, 2
      %p48 = por %p46, %p47
      %p49 = scmp.ne.s32.totalorder %s38, %s39
      %p50 = scmp.eq.s32.totalorder %s30, 0
      %p51 = por %p49, %p50
      %p52 = scmp.ne.s32.totalorder %s38, %s39
      %p53 = scmp.eq.s32.totalorder %s31, 2
      %p54 = por %p52, %p53
      %p56 = scmp.ne.s32.totalorder %s39, %s55
      %p57 = scmp.eq.s32.totalorder %s31, 0
      %p58 = por %p56, %p57
      %s59 = ssub.s32 %s25, %s32
      %p60 = scmp.eq.s32.totalorder %s59, 0
      %s62 = sadd.s32 %s61, 1
      %s63 = scalar_select %p60, %s61, %s62
      %p66 = pneg %p60
      %p67 = scmp.eq.s32.totalorder %s25, 2
      %p68 = por %p66, %p67
      %p69 = scmp.ne.s32.totalorder %s61, %s64
      %p70 = scmp.eq.s32.totalorder %s25, 0
      %p71 = por %p69, %p70
      %p72 = scmp.ne.s32.totalorder %s61, %s64
      %p73 = scmp.eq.s32.totalorder %s30, 2
      %p74 = por %p72, %p73
      %p75 = scmp.ne.s32.totalorder %s64, %s65
      %p76 = scmp.eq.s32.totalorder %s30, 0
      %p77 = por %p75, %p76
      %p78 = scmp.ne.s32.totalorder %s64, %s65
      %p79 = scmp.eq.s32.totalorder %s31, 2
      %p80 = por %p78, %p79
      %p82 = scmp.ne.s32.totalorder %s65, %s81
      %p83 = scmp.eq.s32.totalorder %s31, 0
      %p84 = por %p82, %p83
      %s85 = ssub.s32 %s25, %s32
      %p86 = scmp.eq.s32.totalorder %s85, 0
      %s88 = sadd.s32 %s87, 1
      %s89 = scalar_select %p86, %s87, %s88
      %p92 = pneg %p86
      %p93 = scmp.eq.s32.totalorder %s25, 2
      %p94 = por %p92, %p93
      %p95 = scmp.ne.s32.totalorder %s87, %s90
      %p96 = scmp.eq.s32.totalorder %s25, 0
      %p97 = por %p95, %p96
      %p98 = scmp.ne.s32.totalorder %s87, %s90
      %p99 = scmp.eq.s32.totalorder %s30, 2
      %p100 = por %p98, %p99
      %p101 = scmp.ne.s32.totalorder %s90, %s91
      %p102 = scmp.eq.s32.totalorder %s30, 0
      %p103 = por %p101, %p102
      %p104 = scmp.ne.s32.totalorder %s90, %s91
      %p105 = scmp.eq.s32.totalorder %s31, 2
      %p106 = por %p104, %p105
      %p108 = scmp.ne.s32.totalorder %s91, %s107
      %p109 = scmp.eq.s32.totalorder %s31, 0
      %p110 = por %p108, %p109
      %s112 = sadd.s32 %s111, 1
      %p115 = scmp.eq.s32.totalorder %s25, 2
      %p116 = scmp.ne.s32.totalorder %s111, %s113
      %p117 = scmp.eq.s32.totalorder %s25, 0
      %p118 = por %p116, %p117
      %p119 = scmp.ne.s32.totalorder %s111, %s113
      %p120 = scmp.eq.s32.totalorder %s30, 2
      %p121 = por %p119, %p120
      %p122 = scmp.ne.s32.totalorder %s113, %s114
      %p123 = scmp.eq.s32.totalorder %s30, 0
      %p124 = por %p122, %p123
      %p125 = scmp.ne.s32.totalorder %s113, %s114
      %p126 = scmp.eq.s32.totalorder %s31, 2
      %p127 = por %p125, %p126
      %p129 = scmp.ne.s32.totalorder %s114, %s128
      %p130 = scmp.eq.s32.totalorder %s31, 0
      %p131 = por %p129, %p130
      %s133 = sadd.s32 %s132, 1
      %p136 = scmp.eq.s32.totalorder %s25, 2
      %p137 = scmp.ne.s32.totalorder %s132, %s134
      %p138 = scmp.eq.s32.totalorder %s25, 0
      %p139 = por %p137, %p138
      %p140 = scmp.ne.s32.totalorder %s132, %s134
      %p141 = scmp.eq.s32.totalorder %s30, 2
      %p142 = por %p140, %p141
      %p143 = scmp.ne.s32.totalorder %s134, %s135
      %p144 = scmp.eq.s32.totalorder %s30, 0
      %p145 = por %p143, %p144
      %p146 = scmp.ne.s32.totalorder %s134, %s135
      %p147 = scmp.eq.s32.totalorder %s31, 2
      %p148 = por %p146, %p147
      %p150 = scmp.ne.s32.totalorder %s135, %s149
      %p151 = scmp.eq.s32.totalorder %s31, 0
      %p152 = por %p150, %p151
      %s153 = ssub.s32 %s25, %s32
      %p154 = scmp.eq.s32.totalorder %s153, 0
      %s156 = sadd.s32 %s155, 1
      %s157 = scalar_select %p154, %s155, %s156
      %p160 = pneg %p154
      %p161 = scmp.eq.s32.totalorder %s25, 2
      %p162 = por %p160, %p161
      %p163 = scmp.ne.s32.totalorder %s155, %s158
      %p164 = scmp.eq.s32.totalorder %s25, 0
      %p165 = por %p163, %p164
      %p166 = scmp.ne.s32.totalorder %s155, %s158
      %p167 = scmp.eq.s32.totalorder %s30, 2
      %p168 = por %p166, %p167
      %p169 = scmp.ne.s32.totalorder %s158, %s159
      %p170 = scmp.eq.s32.totalorder %s30, 0
      %p171 = por %p169, %p170
      %p172 = scmp.ne.s32.totalorder %s158, %s159
      %p173 = scmp.eq.s32.totalorder %s31, 2
      %p174 = por %p172, %p173
      %p176 = scmp.ne.s32.totalorder %s159, %s175
      %p177 = scmp.eq.s32.totalorder %s31, 0
      %p178 = por %p176, %p177
      %s179 = ssub.s32 %s25, %s32
      %p180 = scmp.eq.s32.totalorder %s179, 0
      %s182 = sadd.s32 %s181, 1
      %s183 = scalar_select %p180, %s181, %s182
      %p186 = pneg %p180
      %p187 = scmp.eq.s32.totalorder %s25, 2
      %p188 = por %p186, %p187
      %p189 = scmp.ne.s32.totalorder %s181, %s184
      %p190 = scmp.eq.s32.totalorder %s25, 0
      %p191 = por %p189, %p190
      %p192 = scmp.ne.s32.totalorder %s181, %s184
      %p193 = scmp.eq.s32.totalorder %s30, 2
      %p194 = por %p192, %p193
      %p195 = scmp.ne.s32.totalorder %s184, %s185
      %p196 = scmp.eq.s32.totalorder %s30, 0
      %p197 = por %p195, %p196
      %p198 = scmp.ne.s32.totalorder %s184, %s185
      %p199 = scmp.eq.s32.totalorder %s31, 2
      %p200 = por %p198, %p199
      %p202 = scmp.ne.s32.totalorder %s185, %s201
      %p203 = scmp.eq.s32.totalorder %s31, 0
      %p204 = por %p202, %p203
      %p205 = scmp.le.s32.totalorder 1, %s25
      %p206 = scmp.lt.s32.totalorder %s25, 4
      %p207 = pnand %p205, %p206
      %p208 = pneg %p207
      // Predicated region
      $region9: #{tpu_custom_call.1} parent=5 // pred_check
        _
      $region10: #{tpu_custom_call.1} parent=5 // pred_check_branch
        %210 = sbr.rel (%p207) target = $region12
      $region11: #{tpu_custom_call.1} parent=5 // pred_region
        %s211 = ssub.s32 %s25, 1
        // Predicated region
        $region13: #{tpu_custom_call.1} parent=11 // pred_check
          %p212 = pneg %p124
        $region14: #{tpu_custom_call.1} parent=11 // pred_check_branch
          %214 = sbr.rel (%p212) target = $region16
        $region15: #{tpu_custom_call.1} parent=11 // pred_region
          _
        $region16: #{tpu_custom_call.1} parent=11 // pred_fallthru
          _
        // Predicated region
        $region17: #{tpu_custom_call.1} parent=11 // pred_check
          %p215 = pneg %p145
        $region18: #{tpu_custom_call.1} parent=11 // pred_check_branch
          %217 = sbr.rel (%p215) target = $region20
        $region19: #{tpu_custom_call.1} parent=11 // pred_region
          _
        $region20: #{tpu_custom_call.1} parent=11 // pred_fallthru
          _
      $region12: #{tpu_custom_call.1} parent=5 // pred_fallthru
        _
      %p218 = scmp.lt.s32.totalorder %s25, 3
      // Predicated region
      $region21: #{tpu_custom_call.1} parent=5 // pred_check
        %p219 = pneg %p218
      $region22: #{tpu_custom_call.1} parent=5 // pred_check_branch
        %221 = sbr.rel (%p219) target = $region24
      $region23: #{tpu_custom_call.1} parent=5 // pred_region
        // Predicated region
        $region25: #{tpu_custom_call.1} parent=23 // pred_check
          %p222 = pneg %p45
        $region26: #{tpu_custom_call.1} parent=23 // pred_check_branch
          %224 = sbr.rel (%p222) target = $region28
        $region27: #{tpu_custom_call.1} parent=23 // pred_region
          %s225 = sand.u32 %s35, 1
          %s226 = scalar_lea.sflag [#allocation3], %s225
          %s227 = sand.u32 %s35, 1
          %s228 = smul.addr %s227, 32
          %s229 = scalar_lea.vmem [#allocation2], %s228
          %s231 = ssub.s32 512, 512
          %232 = vsyncadd %s226, %s231
          %s233 = smul.addr %s25, 64
          %s234 = scalar_lea.hbm %s0, %s233
          %s235 = sshll.u32 %s229, 4
          %s236 = int_to_ptr.vmem [resolvable:$true] %s235
          %241 = dma.hbm_to_vmem [thread:$0]  %s234, 512, %s236, %s226, 192, 64, 4
        $region28: #{tpu_custom_call.1} parent=23 // pred_fallthru
          _
        // Predicated region
        $region29: #{tpu_custom_call.1} parent=23 // pred_check
          %p242 = pneg %p71
        $region30: #{tpu_custom_call.1} parent=23 // pred_check_branch
          %244 = sbr.rel (%p242) target = $region32
        $region31: #{tpu_custom_call.1} parent=23 // pred_region
          %s245 = sand.u32 %s25, 1
          %s246 = scalar_lea.sflag [#allocation6], %s245
          %s247 = sand.u32 %s61, 1
          %s248 = smul.addr %s247, 32
          %s249 = scalar_lea.vmem [#allocation5], %s248
          %s251 = ssub.s32 512, 512
          %252 = vsyncadd %s246, %s251
          %s253 = smul.addr %s25, 64
          %s254 = scalar_lea.hbm %s1, %s253
          %s255 = sshll.u32 %s249, 4
          %s256 = int_to_ptr.vmem [resolvable:$true] %s255
          %261 = dma.hbm_to_vmem [thread:$0]  %s254, 512, %s256, %s246, 192, 64, 4
        $region32: #{tpu_custom_call.1} parent=23 // pred_fallthru
          _
        // Predicated region
        $region33: #{tpu_custom_call.1} parent=23 // pred_check
          %p262 = pneg %p97
        $region34: #{tpu_custom_call.1} parent=23 // pred_check_branch
          %264 = sbr.rel (%p262) target = $region36
        $region35: #{tpu_custom_call.1} parent=23 // pred_region
          %s265 = sand.u32 %s25, 1
          %s266 = scalar_lea.sflag [#allocation6], %s265
          %s267 = sand.u32 %s87, 1
          %s268 = smul.addr %s267, 16
          %s269 = scalar_lea.vmem [#allocation7], %s268
          %s271 = ssub.s32 256, 256
          %272 = vsyncadd %s266, %s271
          %s273 = smul.addr %s25, 64
          %s274 = scalar_lea.hbm %s2, %s273
          %s275 = sshll.u32 %s269, 4
          %s276 = int_to_ptr.vmem [resolvable:$true] %s275
          %281 = dma.hbm_to_vmem [thread:$0]  %s274, 256, %s276, %s266, 192, 64, 4
        $region36: #{tpu_custom_call.1} parent=23 // pred_fallthru
          _
      $region24: #{tpu_custom_call.1} parent=5 // pred_fallthru
        _
      %p282 = scmp.le.s32.totalorder 1, %s25
      %p283 = scmp.lt.s32.totalorder %s25, 4
      %p284 = pnand %p282, %p283
      %p285 = pneg %p284
      // Predicated region
      $region37: #{tpu_custom_call.1} parent=5 // pred_check
        _
      $region38: #{tpu_custom_call.1} parent=5 // pred_check_branch
        %287 = sbr.rel (%p284) target = $region40
      $region39: #{tpu_custom_call.1} parent=5 // pred_region
        %s288 = ssub.s32 %s25, 1
        %s289 = sand.u32 %s38, 1
        %s290 = scalar_lea.sflag [#allocation3], %s289
        %s291 = sand.u32 %s38, 1
        %s292 = smul.addr %s291, 32
        %s293 = scalar_lea.vmem [#allocation2], %s292
        // Predicated region
        $region41: #{tpu_custom_call.1} parent=39 // pred_check
          %p294 = pneg %p51
        $region42: #{tpu_custom_call.1} parent=39 // pred_check_branch
          %296 = sbr.rel (%p294) target = $region44
        $region43: #{tpu_custom_call.1} parent=39 // pred_region
          %297 = dma.done %s290, 512
        $region44: #{tpu_custom_call.1} parent=39 // pred_fallthru
          _
        %s298 = sand.u32 %s30, 1
        %s299 = scalar_lea.sflag [#allocation6], %s298
        %s300 = sand.u32 %s64, 1
        %s301 = smul.addr %s300, 32
        %s302 = scalar_lea.vmem [#allocation5], %s301
        // Predicated region
        $region45: #{tpu_custom_call.1} parent=39 // pred_check
          %p303 = pneg %p77
        $region46: #{tpu_custom_call.1} parent=39 // pred_check_branch
          %305 = sbr.rel (%p303) target = $region48
        $region47: #{tpu_custom_call.1} parent=39 // pred_region
          %306 = dma.done %s299, 512
        $region48: #{tpu_custom_call.1} parent=39 // pred_fallthru
          _
        %s307 = sand.u32 %s30, 1
        %s308 = scalar_lea.sflag [#allocation6], %s307
        %s309 = sand.u32 %s90, 1
        %s310 = smul.addr %s309, 16
        %s311 = scalar_lea.vmem [#allocation7], %s310
        // Predicated region
        $region49: #{tpu_custom_call.1} parent=39 // pred_check
          %p312 = pneg %p103
        $region50: #{tpu_custom_call.1} parent=39 // pred_check_branch
          %314 = sbr.rel (%p312) target = $region52
        $region51: #{tpu_custom_call.1} parent=39 // pred_region
          %315 = dma.done %s308, 256
        $region52: #{tpu_custom_call.1} parent=39 // pred_fallthru
          _
        %s316 = sand.u32 %s38, 1
        %s317 = scalar_lea.sflag [#allocation3], %s316
        %s318 = sand.u32 %s38, 1
        %s319 = smul.addr %s318, 32
        %s320 = scalar_lea.vmem [#allocation2], %s319
        %p321 = pneg %p51
        %p322 = pneg %p48
        %s323 = sand.u32 %s30, 1
        %s324 = scalar_lea.sflag [#allocation6], %s323
        %s325 = sand.u32 %s64, 1
        %s326 = smul.addr %s325, 32
        %s327 = scalar_lea.vmem [#allocation5], %s326
        %p328 = pneg %p77
        %p329 = pneg %p74
        %s330 = sand.u32 %s30, 1
        %s331 = scalar_lea.sflag [#allocation6], %s330
        %s332 = sand.u32 %s90, 1
        %s333 = smul.addr %s332, 16
        %s334 = scalar_lea.vmem [#allocation7], %s333
        %p335 = pneg %p103
        %p336 = pneg %p100
        %p337 = pneg %p124
        %p338 = pneg %p121
        %p339 = pneg %p145
        %p340 = pneg %p142
        %p341 = pneg %p171
        %p342 = pneg %p168
        %s343 = sand.u32 %s158, 1
        %s344 = scalar_lea.sflag [#allocation4], %s343
        %s345 = sand.u32 %s158, 1
        %s346 = smul.addr %s345, 2
        %s347 = scalar_lea.vmem [#allocation8], %s346
        %p348 = pneg %p197
        %p349 = pneg %p194
        %s350 = sand.u32 %s184, 1
        %s351 = scalar_lea.sflag [#allocation10], %s350
        %s352 = sand.u32 %s184, 1
        %s353 = smul.addr %s352, 4
        %s354 = scalar_lea.vmem [#allocation9], %s353
        %v355 = vld [vmem:[%s293] sm:$0xf]
        %v356 = vld [vmem:[%s293 + $0x4] sm:$0xf]
        %v357 = vld [vmem:[%s293 + $0x8] sm:$0xf]
        %v358 = vld [vmem:[%s293 + $0xc] sm:$0xf]
        %v359 = vld [vmem:[%s293 + $0x10] sm:$0xf]
        %v360 = vld [vmem:[%s293 + $0x14] sm:$0xf]
        %v361 = vld [vmem:[%s293 + $0x18] sm:$0xf]
        %v362 = vld [vmem:[%s293 + $0x1c] sm:$0xf]
        %v363 = vunpack.c.l.bf16 %v355
        %v364 = vunpack.c.l.bf16 %v356
        %v365 = vunpack.c.l.bf16 %v357
        %v366 = vunpack.c.l.bf16 %v358
        %v367 = vunpack.c.l.bf16 %v359
        %v368 = vunpack.c.l.bf16 %v360
        %v369 = vunpack.c.l.bf16 %v361
        %v370 = vunpack.c.l.bf16 %v362
        %v371 = vld [vmem:[%s302] sm:$0xf]
        %v372 = vld [vmem:[%s302 + $0x4] sm:$0xf]
        %v373 = vld [vmem:[%s302 + $0x8] sm:$0xf]
        %v374 = vld [vmem:[%s302 + $0xc] sm:$0xf]
        %v375 = vld [vmem:[%s302 + $0x10] sm:$0xf]
        %v376 = vld [vmem:[%s302 + $0x14] sm:$0xf]
        %v377 = vld [vmem:[%s302 + $0x18] sm:$0xf]
        %v378 = vld [vmem:[%s302 + $0x1c] sm:$0xf]
        %v379 = vunpack.c.l.bf16 %v371
        %v380 = vunpack.c.l.bf16 %v372
        %v381 = vunpack.c.l.bf16 %v373
        %v382 = vunpack.c.l.bf16 %v374
        %v383 = vunpack.c.l.bf16 %v375
        %v384 = vunpack.c.l.bf16 %v376
        %v385 = vunpack.c.l.bf16 %v377
        %v386 = vunpack.c.l.bf16 %v378
        %v387 = vld [vmem:[%s311] sm:$0xf]
        %v388 = vld [vmem:[%s311 + $0x4] sm:$0xf]
        %v389 = vld [vmem:[%s311 + $0x8] sm:$0xf]
        %v390 = vld [vmem:[%s311 + $0xc] sm:$0xf]
        %v391 = vunpack.c.l.bf16 %v387
        %v392 = vunpack.c.l.bf16 %v388
        %v393 = vunpack.c.l.bf16 %v389
        %v394 = vunpack.c.l.bf16 %v390
        %v395 = vmul.f32 %v363, %v379
        %v396 = vmul.f32 %v364, %v380
        %v397 = vmul.f32 %v365, %v381
        %v398 = vmul.f32 %v366, %v382
        %v399 = vmul.f32 %v367, %v383
        %v400 = vmul.f32 %v368, %v384
        %v401 = vmul.f32 %v369, %v385
        %v402 = vmul.f32 %v370, %v386
        %v403 = vmul.f32 %v399, %v391
        %v404 = vmul.f32 %v400, %v392
        %v405 = vmul.f32 %v401, %v393
        %v406 = vmul.f32 %v402, %v394
        %v407 = vadd.f32 %v395, %v396
        %v408 = vadd.f32 %v407, %v397
        %v409 = vadd.f32 %v408, %v398
        %v410 = vrot.slane %v409, 4
        %v411 = vadd.f32 %v409, %v410
        %v412 = vrot.slane %v411, 2
        %v413 = vadd.f32 %v411, %v412
        %v414 = vrot.slane %v413, 1
        %v415 = vadd.f32 %v413, %v414
        %v416 = vadd.f32 %v403, %v404
        %v417 = vadd.f32 %v416, %v405
        %v418 = vadd.f32 %v417, %v406
        %v419 = vrot.slane %v418, 4
        %v420 = vadd.f32 %v418, %v419
        %v421 = vrot.slane %v420, 2
        %v422 = vadd.f32 %v420, %v421
        %v423 = vrot.slane %v422, 1
        %v424 = vadd.f32 %v422, %v423
        %v425 = vadd.f32 %v415, %v424
        %v426 = vsub.f32 0.0, %v415
        %v427 = vmul.f32 %v426, 1.442695
        %v428 = vpow.pop %v427
        %v429 = vadd.f32 %v428, 1.0
        %v430 = vrcp.pop %v429
        %v431 = vmul.f32 1.0, %v430
        %v432 = vsub.f32 0.0, %v425
        %v433 = vmul.f32 %v432, 1.442695
        %v434 = vpow.pop %v433
        %v435 = vadd.f32 %v434, 1.0
        %v436 = vrcp.pop %v435
        %v437 = vmul.f32 1.0, %v436
        %vm438 = vcmask 1040384
        %v439 = vsel %vm438, %v431, %v437
        %440 = vst [vmem:[%s347] sm:$0x3] %v439
        %v441 = vld [vmem:[%s3] sm:$0xf]
        %v442 = vld [vmem:[%s4] sm:$0xf]
        %444 = vset.pattern.permute.xlu0 0
        %445 = vperm.xlu0 %444, %v442
        %v446 = vpop.permute.xlu0 %445
        %vm448 = vcmask 261120
        %v450 = vsel %vm448, %v441, 0
        %452 = vmatprep.subr.mxu0 0.0
        %453 = vmatpush1.msra.mxu0 %v395
        %454 = vmatprep.subr.mxu0 0.0
        %455 = vmatpush1.msra.mxu0 %v396
        %456 = vmatprep.subr.mxu0 0.0
        %457 = vmatpush1.msra.mxu0 %v397
        %458 = vmatprep.subr.mxu0 0.0
        %459 = vmatpush1.msra.mxu0 %v398
        %460 = vmatprep.subr.mxu0 0.0
        %461 = vmatpush1.msra.mxu0 0.0
        %462 = vmatprep.subr.mxu0 0.0
        %463 = vmatpush1.msra.mxu0 0.0
        %464 = vmatprep.subr.mxu0 0.0
        %465 = vmatpush1.msra.mxu0 0.0
        %466 = vmatprep.subr.mxu0 0.0
        %467 = vmatpush1.msra.mxu0 0.0
        %468 = vmatprep.subr.mxu0 0.0
        %469 = vmatpush1.msra.mxu0 0.0
        %470 = vmatprep.subr.mxu0 0.0
        %471 = vmatpush1.msra.mxu0 0.0
        %472 = vmatprep.subr.mxu0 0.0
        %473 = vmatpush1.msra.mxu0 0.0
        %474 = vmatprep.subr.mxu0 0.0
        %475 = vmatpush1.msra.mxu0 0.0
        %476 = vmatprep.subr.mxu0 0.0
        %477 = vmatpush1.msra.mxu0 0.0
        %478 = vmatprep.subr.mxu0 0.0
        %479 = vmatpush1.msra.mxu0 0.0
        %480 = vmatprep.subr.mxu0 0.0
        %481 = vmatpush1.msra.mxu0 0.0
        %482 = vmatprep.subr.mxu0 0.0
        %483 = vmatpush1.msra.mxu0 0.0
        %484 = vmatprep.subr.mxu0 0.0
        %485 = vmatpush1.msra.mxu0 0.0
        %486 = vmatprep.subr.mxu0 0.0
        %487 = vmatpush1.msra.mxu0 0.0
        %488 = vmatprep.subr.mxu0 0.0
        %489 = vmatpush1.msra.mxu0 0.0
        %490 = vmatprep.subr.mxu0 0.0
        %491 = vmatpush1.msra.mxu0 0.0
        %492 = vmatprep.subr.mxu0 0.0
        %493 = vmatpush1.msra.mxu0 0.0
        %494 = vmatprep.subr.mxu0 0.0
        %495 = vmatpush1.msra.mxu0 0.0
        %496 = vmatprep.subr.mxu0 0.0
        %497 = vmatpush1.msra.mxu0 0.0
        %498 = vmatprep.subr.mxu0 0.0
        %499 = vmatpush1.msra.mxu0 0.0
        %500 = vmatprep.subr.mxu0 0.0
        %501 = vmatpush1.msra.mxu0 0.0
        %502 = vmatprep.subr.mxu0 0.0
        %503 = vmatpush1.msra.mxu0 0.0
        %504 = vmatprep.subr.mxu0 0.0
        %505 = vmatpush1.msra.mxu0 0.0
        %506 = vmatprep.subr.mxu0 0.0
        %507 = vmatpush1.msra.mxu0 0.0
        %508 = vmatprep.subr.mxu0 0.0
        %509 = vmatpush1.msra.mxu0 0.0
        %510 = vmatprep.subr.mxu0 0.0
        %511 = vmatpush1.msra.mxu0 0.0
        %512 = vmatprep.subr.mxu0 0.0
        %513 = vmatpush1.msra.mxu0 0.0
        %514 = vmatprep.subr.mxu0 0.0
        %515 = vmatpush1.msra.mxu0 0.0
        %516 = vmatprep.mubr.f32.mxu0 0.0
        %517 = vmatmul.mubr.f32.gmra.mrb[0].mxu0 %v450
        %v518 = vpop.f32.mrb[0].mxu0
        %v519 = vadd.f32 %v446, %v518
        %v520 = vpop.f32.mrb[0].mxu0
        %521 = vdwg.mxu0
        %vm522 = vcmask 1043456
        %v523 = vsel %vm522, %v519, -inf
        %v524 = vrot.slane %v523, 4
        %v525 = vmax.f32 %v523, %v524
        %v526 = vrot.slane %v525, 2
        %v527 = vmax.f32 %v525, %v526
        %v528 = vrot.slane %v527, 1
        %v529 = vmax.f32 %v527, %v528
        %v530 = vsub.f32 %v519, %v529
        %v531 = vmul.f32 %v530, 1.442695
        %v532 = vpow.pop %v531
        %v533 = vsel %vm522, %v532, 0.0
        %v534 = vrot.slane %v533, 4
        %v535 = vadd.f32 %v533, %v534
        %v536 = vrot.slane %v535, 2
        %v537 = vadd.f32 %v535, %v536
        %v538 = vrot.slane %v537, 1
        %v539 = vadd.f32 %v537, %v538
        %v540 = vlog2.pop %v539
        %v541 = vmul.f32 %v540, 0.6931472
        %v542 = vsub.f32 %v530, %v541
        %543 = vst [vmem:[%s354] sm:$0xf] %v542
        %s544 = sand.u32 %s158, 1
        %s545 = scalar_lea.sflag [#allocation4], %s544
        %s546 = sand.u32 %s158, 1
        %s547 = smul.addr %s546, 2
        %s548 = scalar_lea.vmem [#allocation8], %s547
        %s549 = sand.u32 %s184, 1
        %s550 = scalar_lea.sflag [#allocation10], %s549
        %s551 = sand.u32 %s184, 1
        %s552 = smul.addr %s551, 4
        %s553 = scalar_lea.vmem [#allocation9], %s552
        // Predicated region
        $region53: #{tpu_custom_call.1} parent=39 // pred_check
          %p554 = pneg %p168
        $region54: #{tpu_custom_call.1} parent=39 // pred_check_branch
          %556 = sbr.rel (%p554) target = $region56
        $region55: #{tpu_custom_call.1} parent=39 // pred_region
          %s558 = ssub.s32 32, 32
          %559 = vsyncadd %s545, %s558
          %s560 = smul.addr %s30, 32
          %s561 = scalar_lea.hbm %s5, %s560
          %s563 = sshll.u32 %s548, 4
          %s564 = int_to_ptr.vmem [resolvable:$true] %s563
          %566 = dma.vmem_to_hbm [thread:$0]  %s564, 32, %s561, %s545
        $region56: #{tpu_custom_call.1} parent=39 // pred_fallthru
          _
        // Predicated region
        $region57: #{tpu_custom_call.1} parent=39 // pred_check
          %p567 = pneg %p194
        $region58: #{tpu_custom_call.1} parent=39 // pred_check_branch
          %569 = sbr.rel (%p567) target = $region60
        $region59: #{tpu_custom_call.1} parent=39 // pred_region
          %s571 = ssub.s32 64, 64
          %572 = vsyncadd %s550, %s571
          %s573 = smul.addr %s30, 64
          %s574 = scalar_lea.hbm %s6, %s573
          %s576 = sshll.u32 %s553, 4
          %s577 = int_to_ptr.vmem [resolvable:$true] %s576
          %579 = dma.vmem_to_hbm [thread:$0]  %s577, 64, %s574, %s550
        $region60: #{tpu_custom_call.1} parent=39 // pred_fallthru
          _
      $region40: #{tpu_custom_call.1} parent=5 // pred_fallthru
        _
      %p580 = scmp.le.s32.totalorder 2, %s25
      // Predicated region
      $region61: #{tpu_custom_call.1} parent=5 // pred_check
        %p581 = pneg %p580
      $region62: #{tpu_custom_call.1} parent=5 // pred_check_branch
        %583 = sbr.rel (%p581) target = $region64
      $region63: #{tpu_custom_call.1} parent=5 // pred_region
        %s584 = ssub.s32 %s25, 2
        // Predicated region
        $region65: #{tpu_custom_call.1} parent=63 // pred_check
          %p585 = pneg %p174
        $region66: #{tpu_custom_call.1} parent=63 // pred_check_branch
          %587 = sbr.rel (%p585) target = $region68
        $region67: #{tpu_custom_call.1} parent=63 // pred_region
          %s588 = sand.u32 %s159, 1
          %s589 = scalar_lea.sflag [#allocation4], %s588
          %s590 = sand.u32 %s159, 1
          %s591 = smul.addr %s590, 2
          %s592 = scalar_lea.vmem [#allocation8], %s591
          %593 = dma.done %s589, 32
        $region68: #{tpu_custom_call.1} parent=63 // pred_fallthru
          _
        // Predicated region
        $region69: #{tpu_custom_call.1} parent=63 // pred_check
          %p594 = pneg %p200
        $region70: #{tpu_custom_call.1} parent=63 // pred_check_branch
          %596 = sbr.rel (%p594) target = $region72
        $region71: #{tpu_custom_call.1} parent=63 // pred_region
          %s597 = sand.u32 %s185, 1
          %s598 = scalar_lea.sflag [#allocation10], %s597
          %s599 = sand.u32 %s185, 1
          %s600 = smul.addr %s599, 4
          %s601 = scalar_lea.vmem [#allocation9], %s600
          %602 = dma.done %s598, 64
        $region72: #{tpu_custom_call.1} parent=63 // pred_fallthru
          _
      $region64: #{tpu_custom_call.1} parent=5 // pred_fallthru
        _
    $region6: #{tpu_custom_call.1} parent=1 // loop_footer
      %s29 = sadd.s32 1, %s25
    $region7: #{tpu_custom_call.1} parent=1 // loop_footer_branch
      %24 = sbr.rel target = $region3
    $region8: #{tpu_custom_call.1} parent=1 // loop_exit
      _
    %603 = vsyncpa [#allocation3], 1
    %s604 = scalar_lea.sflag [#allocation3], 1
    %605 = vsyncpa %s604, 1
    %606 = vsyncpa [#allocation6], 1
    %s607 = scalar_lea.sflag [#allocation6], 1
    %608 = vsyncpa %s607, 1
    %609 = vsyncpa [#allocation4], 1
    %s610 = scalar_lea.sflag [#allocation4], 1
    %611 = vsyncpa %s610, 1
    %612 = vsyncpa [#allocation10], 1
    %s613 = scalar_lea.sflag [#allocation10], 1
    %614 = vsyncpa %s613, 1

</llo_original>
